<compile_context>
chip_gen: v7x
topology: tpu7x:2x2x1
jax: 0.10.0
libtpu: 0.0.40
codegen_flags: <defaults>
</compile_context>

<pallas_src>
import functools

import jax
import jax.numpy as jnp
from jax.experimental import pallas as pl
from jax.experimental.pallas import tpu as pltpu


def _round_up(n: int, m: int) -> int:
    return ((n + m - 1) // m) * m


def _cdiv(n: int, m: int) -> int:
    return (n + m - 1) // m


def _sublanes(dtype) -> int:
    # Sublane packing multiple: f32 -> 8, bf16 -> 16, int8/fp8 -> 32.
    return {4: 8, 2: 16, 1: 32}.get(jnp.dtype(dtype).itemsize, 8)


def _vmem_tile_bytes(rows: int, cols: int, dtype) -> int:
    # VMEM buffers are physically padded to (sublane, 128-lane) tiles.
    itemsize = jnp.dtype(dtype).itemsize
    return (_round_up(max(rows, 1), _sublanes(dtype))
            * _round_up(max(cols, 1), 128) * itemsize)


def prepare_ditto_head_params(weight, bias, *, block_c: int = 1024, param_dtype=None):
    """One-time init: transpose + lane-pad the nn.Linear(H, C) parameters.

    weight: (C, H) as stored by nn.Linear; bias: (C,).
    Returns (w_padded, b_padded) with shapes (H, C_pad) and (1, C_pad).
    Call once at model init so no per-forward HBM copy of the weight happens.
    Optionally cast once to `param_dtype` (e.g. bf16) here instead of per call.
    """
    C, H = weight.shape
    assert bias.shape == (C,)
    if param_dtype is not None:
        weight = weight.astype(param_dtype)
        bias = bias.astype(param_dtype)

    if C <= 32:
        # Tiny head: padding C to 128 would inflate weight HBM traffic by up to
        # 16x per forward for a masked-store saving that is negligible here.
        c_pad = C
    elif C <= block_c:
        c_pad = _round_up(C, 128)        # lane-dense (unmasked) output stores
    else:
        assert block_c % 128 == 0
        c_pad = _round_up(C, block_c)    # class dim will be grid-tiled

    w_padded = jnp.pad(jnp.transpose(weight), ((0, 0), (0, c_pad - C)))  # (H, C_pad)
    b_padded = jnp.pad(bias, (0, c_pad - C)).reshape(1, c_pad)           # (1, C_pad)
    return w_padded, b_padded


def _head_kernel(x_ref, w_ref, b_ref, o_ref):
    # x_ref: (TB, H) CLS activations; w_ref: (H, TC); b_ref: (1, TC); o_ref: (TB, TC)
    y = jnp.dot(x_ref[...], w_ref[...], preferred_element_type=jnp.float32)
    o_ref[...] = (y + b_ref[...]).astype(o_ref.dtype)


def ditto_classification_head(features, w_padded, b_padded, *, num_classes: int,
                              block_b: int = 256, block_c: int = 1024):
    """features: (B, S, H); w_padded: (H, C_pad); b_padded: (1, C_pad) -> (B, num_classes).

    block_b: batch tile (256 fills a v6e/v7x 256x256 MXU M-tile; use 128 on v5e).
    block_c: class tile, only used when C_pad > block_c (very large heads);
             must match the value given to prepare_ditto_head_params.
    """
    B, S, H = features.shape
    Hw, C_pad = w_padded.shape
    assert Hw == H and b_padded.shape == (1, C_pad) and num_classes <= C_pad

    # ---- fused CLS gather ---------------------------------------------------
    if H % 128 == 0 or S == 1:
        # Free row-major view; the activation BlockSpec reads only the first H
        # lanes of each (S*H)-wide row == the CLS token.  Only B*H elements are
        # DMA'd from HBM and no wrapper-side slice is materialized.
        x_in = features.reshape(B, S * H)
    else:
        # TODO(synk): unaligned H would need a masked/element gather; fall back
        # to a wrapper-side slice (one extra B*H HBM pass) to stay lane-legal.
        x_in = features[:, 0, :]

    # ---- tiling ---------------------------------------------------------------
    sub = _sublanes(x_in.dtype)                       # dtype-aware sublane rounding
    TB = min(block_b, _round_up(B, sub))
    if B >= 2 * sub:
        # Keep >=2 parallel batch steps so v7x's second TensorCore has work and
        # the activation DMA has something to pipeline against.
        TB = min(TB, max(sub, _round_up(_cdiv(B, 2), sub)))
    if TB >= B:
        TB = B                                        # single full-extent block
    nb = _cdiv(B, TB)

    if C_pad > block_c:
        assert block_c % 128 == 0 and C_pad % block_c == 0, (
            "block_c must match prepare_ditto_head_params")
        TC = block_c
    else:
        TC = C_pad
    nc = C_pad // TC

    out_dtype = jnp.result_type(features.dtype, w_padded.dtype)

    # ---- specs ----------------------------------------------------------------
    # Grid: class axis outermost so each weight tile streams from HBM exactly
    # once; batch axis innermost.  Both axes are independent -> "parallel".
    x_spec = pl.BlockSpec((TB, H), lambda j, i: (i, 0))
    out_spec = pl.BlockSpec((TB, TC), lambda j, i: (i, j))
    if nc == 1:
        # Fully resident weight/bias: fetched once, so single-buffer them.
        w_spec = pl.BlockSpec((H, TC), lambda j, i: (0, j), pipeline_mode=pl.Buffered(1))
        b_spec = pl.BlockSpec((1, TC), lambda j, i: (0, j), pipeline_mode=pl.Buffered(1))
        n_w_buf = 1
    else:
        w_spec = pl.BlockSpec((H, TC), lambda j, i: (0, j))
        b_spec = pl.BlockSpec((1, TC), lambda j, i: (0, j))
        n_w_buf = 2

    # Right-sized VMEM request (tile-padded buffer bytes + headroom).
    vmem_need = (2 * _vmem_tile_bytes(TB, H, x_in.dtype)
                 + n_w_buf * _vmem_tile_bytes(H, TC, w_padded.dtype)
                 + n_w_buf * _vmem_tile_bytes(1, TC, b_padded.dtype)
                 + 2 * _vmem_tile_bytes(TB, TC, out_dtype))
    vmem_limit = min(max(vmem_need + (4 << 20), 8 << 20), 128 << 20)

    def _isz(a):
        return jnp.dtype(a.dtype).itemsize

    cost = pl.CostEstimate(                      # logical (unpadded) sizes
        flops=2 * B * H * num_classes,
        transcendentals=0,
        bytes_accessed=(B * H * _isz(x_in)
                        + (H * num_classes + num_classes) * _isz(w_padded)
                        + B * num_classes * jnp.dtype(out_dtype).itemsize),
    )

    # TODO(synk): on v7x a VMEM_SHARED/CMEM weight via core_map would avoid the
    # second TensorCore re-fetching the resident weight; not worth it at
    # classification-head sizes.
    out = pl.pallas_call(
        _head_kernel,
        out_shape=jax.ShapeDtypeStruct((nb * TB, C_pad), out_dtype),
        grid=(nc, nb),
        in_specs=[x_spec, w_spec, b_spec],
        out_specs=out_spec,
        compiler_params=pltpu.CompilerParams(
            dimension_semantics=("parallel", "parallel"),
            vmem_limit_bytes=vmem_limit,
        ),
        cost_estimate=cost,
    )(x_in, w_padded, b_padded)

    return out[:B, :num_classes]


if __name__ == "__main__":
    # Small shapes consistent with the forward: (batch, seq, hidden) -> (batch, classes).
    # H=128 keeps the CLS gather lane-aligned so the fused path is exercised.
    B, S, H, C = 2, 8, 128, 8

    key = jax.random.PRNGKey(0)
    kf, kw, kb = jax.random.split(key, 3)

    features = jax.random.normal(kf, (B, S, H), dtype=jnp.float32)
    # out_proj is None in __init__ and assigned externally in the original code;
    # synthesize nn.Linear(H, C) parameters (weight: (C, H), bias: (C,)).
    weight = jax.random.normal(kw, (C, H), dtype=jnp.float32) * 0.02
    bias = jax.random.normal(kb, (C,), dtype=jnp.float32) * 0.02

    # One-time init: transpose / pad the parameters for the kernel.
    w_padded, b_padded = prepare_ditto_head_params(weight, bias)

    fwd = jax.jit(functools.partial(ditto_classification_head, num_classes=C))
    out = jax.block_until_ready(fwd(features, w_padded, b_padded))

    # Reference check in plain JAX.
    ref = features[:, 0, :] @ weight.T + bias
    assert out.shape == (B, C)
    assert jnp.allclose(out, ref, atol=1e-5, rtol=1e-5)

    print("KERNEL_OK")
</pallas_src>

<mosaic_0001>
module attributes {stable_mosaic.version = 11 : i64} {
  func.func @_head_kernel(%arg0: i32, %arg1: i32, %arg2: memref<2x128xf32, #tpu.memory_space<vmem>>, %arg3: memref<128x8xf32, #tpu.memory_space<vmem>>, %arg4: memref<1x8xf32, #tpu.memory_space<vmem>>, %arg5: memref<2x8xf32, #tpu.memory_space<vmem>>) attributes {dimension_semantics = [#tpu.dimension_semantics<parallel>, #tpu.dimension_semantics<parallel>], iteration_bounds = array<i64: 1, 1>, scalar_prefetch = 0 : i64, scratch_operands = 0 : i64, tpu.core_type = #tpu.core_type<tc>, window_params = [{transform_indices = @transform_0, window_bounds = array<i64: 2, 128>}, {pipeline_mode = #tpu.pipeline_mode<synchronous>, transform_indices = @transform_1, window_bounds = array<i64: 128, 8>}, {pipeline_mode = #tpu.pipeline_mode<synchronous>, transform_indices = @transform_2, window_bounds = array<i64: 1, 8>}, {transform_indices = @transform_3, window_bounds = array<i64: 2, 8>}]} {
    %c0 = arith.constant 0 : index
    %c0_0 = arith.constant 0 : index
    %0 = vector.load %arg2[%c0, %c0_0] : memref<2x128xf32, #tpu.memory_space<vmem>>, vector<2x128xf32>
    %c0_1 = arith.constant 0 : index
    %c0_2 = arith.constant 0 : index
    %1 = vector.load %arg3[%c0_1, %c0_2] : memref<128x8xf32, #tpu.memory_space<vmem>>, vector<128x8xf32>
    %cst = arith.constant dense<0.000000e+00> : vector<2x8xf32>
    %2 = tpu.matmul %0, %1, %cst {dimension_numbers = #tpu.dot_dimension_numbers<[1], [0], [0], [1], [0, 0, 1, 1], [], []>} : vector<2x128xf32>, vector<128x8xf32>, vector<2x8xf32> -> vector<2x8xf32>
    %c0_3 = arith.constant 0 : index
    %c0_4 = arith.constant 0 : index
    %3 = vector.load %arg4[%c0_3, %c0_4] : memref<1x8xf32, #tpu.memory_space<vmem>>, vector<1x8xf32>
    %4 = vector.broadcast %3 : vector<1x8xf32> to vector<2x8xf32>
    %5 = arith.addf %2, %4 : vector<2x8xf32>
    %c0_5 = arith.constant 0 : index
    %c0_6 = arith.constant 0 : index
    %6 = vector.load %arg5[%c0_5, %c0_6] : memref<2x8xf32, #tpu.memory_space<vmem>>, vector<2x8xf32>
    tpu.vector_store %arg5[%c0_5, %c0_6], %5 {strides = array<i32>} : memref<2x8xf32, #tpu.memory_space<vmem>>, vector<2x8xf32>,
    return
  }
  func.func @transform_0(%arg0: i32, %arg1: i32) -> (i32, i32) {
    %c0_i32 = arith.constant 0 : i32
    %c0_i32_0 = arith.constant 0 : i32
    return %arg1, %c0_i32 : i32, i32
  }
  func.func @transform_1(%arg0: i32, %arg1: i32) -> (i32, i32) {
    %c0_i32 = arith.constant 0 : i32
    %c0_i32_0 = arith.constant 0 : i32
    return %c0_i32, %arg0 : i32, i32
  }
  func.func @transform_2(%arg0: i32, %arg1: i32) -> (i32, i32) {
    %c0_i32 = arith.constant 0 : i32
    %c0_i32_0 = arith.constant 0 : i32
    return %c0_i32, %arg0 : i32, i32
  }
  func.func @transform_3(%arg0: i32, %arg1: i32) -> (i32, i32) {
    %c0_i32 = arith.constant 0 : i32
    return %arg1, %arg0 : i32, i32
  }
}

</mosaic_0001>

<llo_original>
// kernel: ditto_classification_head.1
$region0: #{ditto_classification_head.1}
  #allocation0 [shape = 'u32[]', space=smem, size = 0x4, offset = 0x4, fixed_abs, tag = 'smem constant byte address 0x4 - core index']
  #allocation1 [shape = 'u32[144,128]{1,0:T(1,128)}', space=vmem, size = 0x12000, scoped, tag = 'internal scratch']
  %s0 = inlined_call_operand.vmem [shape: f32[2,1024], index: 0, kind: input, shape index: {}]
  %s1 = inlined_call_operand.vmem [shape: f32[128,8], index: 1, kind: input, shape index: {}]
  %s2 = inlined_call_operand.vmem [shape: f32[1,8], index: 2, kind: input, shape index: {}]
  %s3 = inlined_call_operand.hbm [shape: f32[2,8], index: 3, kind: output, shape index: {}]
  %s4 = sld [smem:[#allocation0]]
  $region22: #{ditto_classification_head.1} parent=0
    _
  %s6 = ssub.s32 1, %s4
  %s7 = scalar_select 0, %s6, %s4
  $region1: #{ditto_classification_head.1} parent=0
    #allocation2 [shape = 'u8[1024]{0}', space=vmem, size = 0x400, scoped, tag = 'output window, operand 0, single buffered']
    #allocation3 [shape = 's32[1]{0}', space=sflag, size = 0x4, scoped, tag = 'scoped memory for ditto_classification_head.1']
    %8 = vsyncpa [#allocation3], 0
    // Predicated region
    $region2: #{ditto_classification_head.1} parent=1 // pred_check
      _
    $region3: #{ditto_classification_head.1} parent=1 // pred_check_branch
      %10 = sbr.rel (0) target = $region5
    $region4: #{ditto_classification_head.1} parent=1 // pred_region
      _
    $region5: #{ditto_classification_head.1} parent=1 // pred_fallthru
      _
    // Predicated region
    $region6: #{ditto_classification_head.1} parent=1 // pred_check
      _
    $region7: #{ditto_classification_head.1} parent=1 // pred_check_branch
      %12 = sbr.rel (0) target = $region9
    $region8: #{ditto_classification_head.1} parent=1 // pred_region
      _
    $region9: #{ditto_classification_head.1} parent=1 // pred_fallthru
      _
    // Predicated region
    $region10: #{ditto_classification_head.1} parent=1 // pred_check
      _
    $region11: #{ditto_classification_head.1} parent=1 // pred_check_branch
      %14 = sbr.rel (0) target = $region13
    $region12: #{ditto_classification_head.1} parent=1 // pred_region
      _
    $region13: #{ditto_classification_head.1} parent=1 // pred_fallthru
      _
    %v15 = vld [vmem:[%s0] sm:$0x3]
    %v16 = vld [vmem:[%s1] sm:$0xff]
    %v17 = vld [vmem:[%s1 + $0x8] sm:$0xff]
    %v18 = vld [vmem:[%s1 + $0x10] sm:$0xff]
    %v19 = vld [vmem:[%s1 + $0x18] sm:$0xff]
    %v20 = vld [vmem:[%s1 + $0x20] sm:$0xff]
    %v21 = vld [vmem:[%s1 + $0x28] sm:$0xff]
    %v22 = vld [vmem:[%s1 + $0x30] sm:$0xff]
    %v23 = vld [vmem:[%s1 + $0x38] sm:$0xff]
    %v24 = vld [vmem:[%s1 + $0x40] sm:$0xff]
    %v25 = vld [vmem:[%s1 + $0x48] sm:$0xff]
    %v26 = vld [vmem:[%s1 + $0x50] sm:$0xff]
    %v27 = vld [vmem:[%s1 + $0x58] sm:$0xff]
    %v28 = vld [vmem:[%s1 + $0x60] sm:$0xff]
    %v29 = vld [vmem:[%s1 + $0x68] sm:$0xff]
    %v30 = vld [vmem:[%s1 + $0x70] sm:$0xff]
    %v31 = vld [vmem:[%s1 + $0x78] sm:$0xff]
    %v32 = vld [vmem:[%s2] sm:$0x1]
    %v34 = vlaneseq
    %v35 = vshrl.u32 %v34, 7
    %v36 = vsub.s32 0, %v35
    %v37 = vrot.slane %v32, %v36
    %39 = vmatprep.subr.mxu0 0.0
    %40 = vmatpush1.msra.mxu0 %v16
    %41 = vmatprep.subr.mxu0 0.0
    %42 = vmatpush1.msra.mxu0 %v17
    %43 = vmatprep.subr.mxu0 0.0
    %44 = vmatpush1.msra.mxu0 %v18
    %45 = vmatprep.subr.mxu0 0.0
    %46 = vmatpush1.msra.mxu0 %v19
    %47 = vmatprep.subr.mxu0 0.0
    %48 = vmatpush1.msra.mxu0 %v20
    %49 = vmatprep.subr.mxu0 0.0
    %50 = vmatpush1.msra.mxu0 %v21
    %51 = vmatprep.subr.mxu0 0.0
    %52 = vmatpush1.msra.mxu0 %v22
    %53 = vmatprep.subr.mxu0 0.0
    %54 = vmatpush1.msra.mxu0 %v23
    %55 = vmatprep.subr.mxu0 0.0
    %56 = vmatpush1.msra.mxu0 %v24
    %57 = vmatprep.subr.mxu0 0.0
    %58 = vmatpush1.msra.mxu0 %v25
    %59 = vmatprep.subr.mxu0 0.0
    %60 = vmatpush1.msra.mxu0 %v26
    %61 = vmatprep.subr.mxu0 0.0
    %62 = vmatpush1.msra.mxu0 %v27
    %63 = vmatprep.subr.mxu0 0.0
    %64 = vmatpush1.msra.mxu0 %v28
    %65 = vmatprep.subr.mxu0 0.0
    %66 = vmatpush1.msra.mxu0 %v29
    %67 = vmatprep.subr.mxu0 0.0
    %68 = vmatpush1.msra.mxu0 %v30
    %69 = vmatprep.subr.mxu0 0.0
    %70 = vmatpush1.msra.mxu0 %v31
    %71 = vmatprep.subr.mxu0 0.0
    %72 = vmatpush1.msra.mxu0 0.0
    %73 = vmatprep.subr.mxu0 0.0
    %74 = vmatpush1.msra.mxu0 0.0
    %75 = vmatprep.subr.mxu0 0.0
    %76 = vmatpush1.msra.mxu0 0.0
    %77 = vmatprep.subr.mxu0 0.0
    %78 = vmatpush1.msra.mxu0 0.0
    %79 = vmatprep.subr.mxu0 0.0
    %80 = vmatpush1.msra.mxu0 0.0
    %81 = vmatprep.subr.mxu0 0.0
    %82 = vmatpush1.msra.mxu0 0.0
    %83 = vmatprep.subr.mxu0 0.0
    %84 = vmatpush1.msra.mxu0 0.0
    %85 = vmatprep.subr.mxu0 0.0
    %86 = vmatpush1.msra.mxu0 0.0
    %87 = vmatprep.subr.mxu0 0.0
    %88 = vmatpush1.msra.mxu0 0.0
    %89 = vmatprep.subr.mxu0 0.0
    %90 = vmatpush1.msra.mxu0 0.0
    %91 = vmatprep.subr.mxu0 0.0
    %92 = vmatpush1.msra.mxu0 0.0
    %93 = vmatprep.subr.mxu0 0.0
    %94 = vmatpush1.msra.mxu0 0.0
    %95 = vmatprep.subr.mxu0 0.0
    %96 = vmatpush1.msra.mxu0 0.0
    %97 = vmatprep.subr.mxu0 0.0
    %98 = vmatpush1.msra.mxu0 0.0
    %99 = vmatprep.subr.mxu0 0.0
    %100 = vmatpush1.msra.mxu0 0.0
    %101 = vmatprep.subr.mxu0 0.0
    %102 = vmatpush1.msra.mxu0 0.0
    %103 = vmatprep.mubr.f32.mxu0 0.0
    %104 = vmatmul.mubr.f32.gmra.mrb[0].mxu0 %v15
    %v105 = vpop.f32.mrb[0].mxu0
    %v106 = vadd.f32 %v37, %v105
    %v107 = vpop.f32.mrb[0].mxu0
    %108 = vdwg.mxu0
    %vm109 = vcmask 58368
    %110 = vst.msk [vmem:[#allocation2] sm:$0x3] %vm109, %v106
    // Predicated region
    $region14: #{ditto_classification_head.1} parent=1 // pred_check
      _
    $region15: #{ditto_classification_head.1} parent=1 // pred_check_branch
      %112 = sbr.rel (0) target = $region17
    $region16: #{ditto_classification_head.1} parent=1 // pred_region
      %s114 = ssub.s32 32, 32
      %115 = vsyncadd [#allocation3], %s114
      %s117 = sshll.u32 [#allocation2], 4
      %s118 = int_to_ptr.vmem [resolvable:$true] %s117
      %120 = dma.vmem_to_hbm [thread:$0]  %s118, 32, %s3, [#allocation3]
    $region17: #{ditto_classification_head.1} parent=1 // pred_fallthru
      _
    // Predicated region
    $region18: #{ditto_classification_head.1} parent=1 // pred_check
      _
    $region19: #{ditto_classification_head.1} parent=1 // pred_check_branch
      %122 = sbr.rel (0) target = $region21
    $region20: #{ditto_classification_head.1} parent=1 // pred_region
      %123 = dma.done [#allocation3], 32
    $region21: #{ditto_classification_head.1} parent=1 // pred_fallthru
      _
    %124 = vsyncpa [#allocation3], 1

</llo_original>
